<compile_context>
chip_gen: v5e
topology: v5e:2x2
jax: 0.10.0
libtpu: 0.0.40
codegen_flags: <defaults>
</compile_context>

<pallas_src>
import functools

import jax
import jax.numpy as jnp
from jax.experimental import pallas as pl
from jax.experimental.pallas import tpu as pltpu


# ------------------------------ helpers -------------------------------------

def _round_up(x, m):
    return ((x + m - 1) // m) * m


def _tpu_generation():
    try:
        kind = jax.devices()[0].device_kind.lower()
    except Exception:
        return "unknown"
    if "v7" in kind:
        return "v7x"
    if "v6" in kind:
        return "v6e"
    if "v5" in kind:
        return "v5e"
    return "unknown"


def _vmem_capacity_bytes(gen):
    try:
        return int(pltpu.get_tpu_info().vmem_capacity_bytes)
    except Exception:
        if gen in ("v5e", "v6e"):
            return 128 * 2 ** 20
        return 64 * 2 ** 20          # conservative default (v7x-sized)


def _pick_th(h):
    # Streaming fallback only.  Prefer multiples of 256 (v6e/v7x MXU is
    # 2x256x256); 128 is the v5e granularity.  384 dropped per review.
    for cand in (512, 256, 128):
        if h % cand == 0:
            return cand
    return h


def _vmem_estimate(tm, d, th, cdt_size, grid_h):
    """Rough VMEM footprint of one pipelined step (bytes)."""
    est = 2 * tm * d * 4                       # x tiles (double-buffered, f32)
    est += 2 * tm * d * 4                      # out tiles
    est += 2 * 2 * d * th * cdt_size           # W1 + W2 tiles (double-buffered)
    est += 2 * (3 * d + th) * 4                # gamma, beta, b1, b2
    est += tm * th * (4 + cdt_size)            # hpre (f32) + gelu (cdt) temps
    if grid_h > 1:
        est += tm * d * (4 + cdt_size)         # acc (f32) + xn (cdt) scratch
    return est


def _gelu(hpre, approx, compute_dtype):
    """hpre is f32.  Returns activation already cast to compute_dtype."""
    if approx:
        # tanh-approx GELU evaluated in compute_dtype: tanh goes to the EUP
        # (otherwise-idle bundle slot); bf16 halves VPU work on v6e/v7x.
        return jax.nn.gelu(hpre.astype(compute_dtype), approximate=True)
    # Module-exact erf GELU (used on the f32 validation path).
    g = 0.5 * hpre * (1.0 + jax.lax.erf(hpre * 0.7071067811865476))
    return g.astype(compute_dtype)


# ------------------------------ kernels --------------------------------------

def _ffn_kernel_resident(x_ref, gamma_ref, beta_ref, w1_ref, b1_ref, w2_ref,
                         b2_ref, o_ref, *, gelu_approx, compute_dtype):
    """Single pass: full W1/W2 are VMEM-resident (constant index maps)."""
    x = x_ref[...].astype(jnp.float32)                       # (tm, D)
    mean = jnp.mean(x, axis=-1, keepdims=True)
    xc = x - mean
    var = jnp.mean(xc * xc, axis=-1, keepdims=True)
    inv = jax.lax.rsqrt(var + 1e-5)                          # eps == F.layer_norm
    xn = (xc * inv * gamma_ref[...] + beta_ref[...]).astype(compute_dtype)

    hpre = jnp.dot(xn, w1_ref[...],
                   preferred_element_type=jnp.float32) + b1_ref[...]   # (tm, H)
    g = _gelu(hpre, gelu_approx, compute_dtype)
    # Dropout(p=0.0) is identity.
    out = jnp.dot(g.astype(w2_ref.dtype), w2_ref[...],
                  preferred_element_type=jnp.float32) + b2_ref[...]    # (tm, D)
    o_ref[...] = out.astype(o_ref.dtype)


def _ffn_kernel_stream(x_ref, gamma_ref, beta_ref, w1_ref, b1_ref, w2_ref,
                       b2_ref, o_ref, xn_ref, acc_ref, *, gelu_approx,
                       compute_dtype):
    """H-tiled reduction: weights streamed, (tm, D) f32 accumulator."""
    h_idx = pl.program_id(1)

    # LayerNorm: once per row tile, reused for every hidden tile.
    @pl.when(h_idx == 0)
    def _():
        x = x_ref[...].astype(jnp.float32)
        mean = jnp.mean(x, axis=-1, keepdims=True)
        xc = x - mean
        var = jnp.mean(xc * xc, axis=-1, keepdims=True)
        inv = jax.lax.rsqrt(var + 1e-5)
        xn = xc * inv * gamma_ref[...] + beta_ref[...]
        xn_ref[...] = xn.astype(xn_ref.dtype)

    hpre = jnp.dot(xn_ref[...], w1_ref[...],
                   preferred_element_type=jnp.float32) + b1_ref[...]   # (tm, th)
    g = _gelu(hpre, gelu_approx, compute_dtype)
    part = jnp.dot(g.astype(w2_ref.dtype), w2_ref[...],
                   preferred_element_type=jnp.float32)                 # (tm, D)

    # First H tile writes directly (no zero-fill + read-modify-write).
    @pl.when(h_idx == 0)
    def _():
        acc_ref[...] = part

    @pl.when(h_idx > 0)
    def _():
        acc_ref[...] += part

    @pl.when(h_idx == pl.num_programs(1) - 1)
    def _():
        o_ref[...] = (acc_ref[...] + b2_ref[...]).astype(o_ref.dtype)


# ------------------------------ wrapper --------------------------------------

def feedforward_pallas(x, gamma, beta, w1, b1, w2, b2, *, tm=None, th=None,
                       compute_dtype=jnp.bfloat16, gelu_approx=None):
    """x: (B, S, D). w1: (D, H), w2: (H, D) -- already (in, out) layout."""
    B, S, D = x.shape
    H = w1.shape[1]
    N = B * S

    if gelu_approx is None:
        # Perf (bf16) path: tanh GELU on the EUP; f32 path: module-exact erf.
        gelu_approx = jnp.dtype(compute_dtype) != jnp.dtype(jnp.float32)

    gen = _tpu_generation()
    vmem_cap = _vmem_capacity_bytes(gen)
    vmem_budget = int(0.85 * vmem_cap)     # <=~54 MiB on v7x, ~108 MiB on v5e/v6e
    cdt_size = jnp.dtype(compute_dtype).itemsize

    # ---- hidden tile: keep full weights VMEM-resident whenever they fit ----
    if th is None:
        if 2 * D * H * cdt_size <= vmem_budget // 3:
            th = H                              # resident weights, grid_h == 1
        else:
            th = _pick_th(H)
    assert H % th == 0, "hidden tile must divide the hidden dim"
    grid_h = H // th

    # ---- row tile: generation target, shrunk until the VMEM estimate fits ----
    auto_tm = tm is None
    if auto_tm:
        tm = {"v6e": 1024, "v7x": 512, "v5e": 512}.get(gen, 512)
    tm = max(8, _round_up(min(tm, max(N, 8)), 8))
    if auto_tm:
        while tm > 256 and _vmem_estimate(tm, D, th, cdt_size, grid_h) > vmem_budget:
            tm = max(256, _round_up(tm // 2, 8))
        # v7x has 2 TensorCores: make sure the "parallel" row axis has >=2 tiles.
        if gen == "v7x" and N > 16 and pl.cdiv(N, tm) < 2:
            tm = max(8, _round_up(pl.cdiv(N, 2), 8))

    grid_rows = pl.cdiv(N, tm)
    n_pad = grid_rows * tm

    # Pad rows so every tile is full (padded rows: mean=var=0 -> xn=beta, no NaN).
    x2 = x.reshape(N, D)
    if n_pad != N:
        x2 = jnp.pad(x2, ((0, n_pad - N), (0, 0)))

    # Matmul operands in compute_dtype; LayerNorm / bias params stay f32.
    w1c = w1.astype(compute_dtype)
    w2c = w2.astype(compute_dtype)
    gamma2 = gamma.reshape(1, D).astype(jnp.float32)
    beta2 = beta.reshape(1, D).astype(jnp.float32)
    b1_2 = b1.reshape(1, H).astype(jnp.float32)
    b2_2 = b2.reshape(1, D).astype(jnp.float32)

    est = _vmem_estimate(tm, D, th, cdt_size, grid_h)
    vmem_limit = int(min(vmem_budget, max(32 * 2 ** 20, int(1.5 * est))))

    if grid_h == 1:
        kernel = functools.partial(_ffn_kernel_resident,
                                   gelu_approx=gelu_approx,
                                   compute_dtype=compute_dtype)
        grid = (grid_rows,)
        in_specs = [
            pl.BlockSpec((tm, D), lambda i: (i, 0)),    # x rows
            pl.BlockSpec((1, D), lambda i: (0, 0)),     # gamma
            pl.BlockSpec((1, D), lambda i: (0, 0)),     # beta
            pl.BlockSpec((D, H), lambda i: (0, 0)),     # W1 (resident)
            pl.BlockSpec((1, H), lambda i: (0, 0)),     # b1
            pl.BlockSpec((H, D), lambda i: (0, 0)),     # W2 (resident)
            pl.BlockSpec((1, D), lambda i: (0, 0)),     # b2
        ]
        out_specs = pl.BlockSpec((tm, D), lambda i: (i, 0))
        scratch_shapes = []
        dim_sem = ("parallel",)
    else:
        kernel = functools.partial(_ffn_kernel_stream,
                                   gelu_approx=gelu_approx,
                                   compute_dtype=compute_dtype)
        grid = (grid_rows, grid_h)
        # TODO(synk): if traces still show exposed weight DMA here, add
        # pipeline_mode=pl.Buffered(3) to the W1/W2 specs.
        in_specs = [
            pl.BlockSpec((tm, D), lambda i, h: (i, 0)),    # x rows
            pl.BlockSpec((1, D), lambda i, h: (0, 0)),     # gamma
            pl.BlockSpec((1, D), lambda i, h: (0, 0)),     # beta
            pl.BlockSpec((D, th), lambda i, h: (0, h)),    # W1 hidden slice
            pl.BlockSpec((1, th), lambda i, h: (0, h)),    # b1 hidden slice
            pl.BlockSpec((th, D), lambda i, h: (h, 0)),    # W2 hidden slice
            pl.BlockSpec((1, D), lambda i, h: (0, 0)),     # b2
        ]
        out_specs = pl.BlockSpec((tm, D), lambda i, h: (i, 0))
        scratch_shapes = [
            pltpu.VMEM((tm, D), compute_dtype),   # normalized x, reused over h
            pltpu.VMEM((tm, D), jnp.float32),     # f32 accumulator
        ]
        dim_sem = ("parallel", "arbitrary")

    out = pl.pallas_call(
        kernel,
        out_shape=jax.ShapeDtypeStruct((n_pad, D), x.dtype),
        grid_spec=pltpu.PrefetchScalarGridSpec(
            num_scalar_prefetch=0,
            grid=grid,
            in_specs=in_specs,
            out_specs=out_specs,
            scratch_shapes=scratch_shapes,
        ),
        compiler_params=pltpu.CompilerParams(
            dimension_semantics=dim_sem,
            vmem_limit_bytes=vmem_limit,
        ),
    )(x2, gamma2, beta2, w1c, b1_2, w2c, b2_2)

    # TODO(synk): for D not a multiple of 128 the output store is a masked
    # (partial-lane) vst; real model dims (D >= 128) get lane-dense stores.
    return out[:N].reshape(B, S, D)


# ------------------------------ reference ------------------------------------

def feedforward_ref(x, gamma, beta, w1, b1, w2, b2, approximate=False):
    """Pure-JAX reference matching the PyTorch module forward (dropout p=0)."""
    mean = jnp.mean(x, axis=-1, keepdims=True)
    var = jnp.mean((x - mean) ** 2, axis=-1, keepdims=True)
    xn = (x - mean) / jnp.sqrt(var + 1e-5) * gamma + beta
    h = xn @ w1 + b1
    h = jax.nn.gelu(h, approximate=approximate)
    return h @ w2 + b2


def _make_params(key, D, H):
    kx, kw1, kb1, kw2, kb2 = jax.random.split(key, 5)
    gamma = jnp.ones((D,), dtype=jnp.float32)        # LayerNorm gamma
    beta = jnp.zeros((D,), dtype=jnp.float32)        # LayerNorm beta buffer
    w1 = jax.random.normal(kw1, (D, H), dtype=jnp.float32) * 0.05
    b1 = jax.random.normal(kb1, (H,), dtype=jnp.float32) * 0.01
    w2 = jax.random.normal(kw2, (H, D), dtype=jnp.float32) * 0.05
    b2 = jax.random.normal(kb2, (D,), dtype=jnp.float32) * 0.01
    return kx, gamma, beta, w1, b1, w2, b2


if __name__ == "__main__":
    MULT = 4

    # ---- Config 1: module-sized toy shapes (dim=32 -> inner_dim=128).
    # Weights fit in VMEM -> resident single-pass kernel. ----
    B, S, D = 2, 8, 32
    H = D * MULT
    kx, gamma, beta, w1, b1, w2, b2 = _make_params(jax.random.PRNGKey(0), D, H)
    x = jax.random.normal(kx, (B, S, D), dtype=jnp.float32)

    # f32 MXU path + exact erf GELU: tight check against the module semantics.
    ref_exact = feedforward_ref(x, gamma, beta, w1, b1, w2, b2, approximate=False)
    out_f32 = jax.block_until_ready(
        feedforward_pallas(x, gamma, beta, w1, b1, w2, b2,
                           compute_dtype=jnp.float32))
    assert out_f32.shape == (B, S, D)
    assert jnp.allclose(out_f32, ref_exact, atol=1e-4, rtol=1e-4), "f32 mismatch (cfg1)"

    # Default perf path: bf16 matmul operands + tanh GELU (EUP).
    ref_tanh = feedforward_ref(x, gamma, beta, w1, b1, w2, b2, approximate=True)
    out_bf16 = jax.block_until_ready(
        feedforward_pallas(x, gamma, beta, w1, b1, w2, b2))
    assert jnp.allclose(out_bf16, ref_tanh, atol=2e-2, rtol=2e-2), "bf16 mismatch (cfg1)"

    # ---- Config 2: force the streaming (H-tiled) kernel with row padding
    # (N=40, tm=16 => 3 row tiles incl. zero-padded tail; th=128 => 2 H steps). ----
    B2, S2, D2 = 2, 20, 64
    H2 = D2 * MULT
    kx2, gamma2, beta2, w1_2, b1_2, w2_2, b2_2 = _make_params(
        jax.random.PRNGKey(1), D2, H2)
    x2 = jax.random.normal(kx2, (B2, S2, D2), dtype=jnp.float32)

    ref2_exact = feedforward_ref(x2, gamma2, beta2, w1_2, b1_2, w2_2, b2_2,
                                 approximate=False)
    out2_f32 = jax.block_until_ready(
        feedforward_pallas(x2, gamma2, beta2, w1_2, b1_2, w2_2, b2_2,
                           tm=16, th=128, compute_dtype=jnp.float32))
    assert out2_f32.shape == (B2, S2, D2)
    assert jnp.allclose(out2_f32, ref2_exact, atol=1e-4, rtol=1e-4), "f32 mismatch (cfg2)"

    ref2_tanh = feedforward_ref(x2, gamma2, beta2, w1_2, b1_2, w2_2, b2_2,
                                approximate=True)
    out2_bf16 = jax.block_until_ready(
        feedforward_pallas(x2, gamma2, beta2, w1_2, b1_2, w2_2, b2_2,
                           tm=16, th=128))
    assert jnp.allclose(out2_bf16, ref2_tanh, atol=2e-2, rtol=2e-2), "bf16 mismatch (cfg2)"

    # ---- Config 3: auto-config path (larger tm, resident weights, multiple
    # row tiles on multi-core parts). ----
    B3, S3, D3 = 2, 320, 128
    H3 = D3 * MULT
    kx3, gamma3, beta3, w1_3, b1_3, w2_3, b2_3 = _make_params(
        jax.random.PRNGKey(2), D3, H3)
    x3 = jax.random.normal(kx3, (B3, S3, D3), dtype=jnp.float32)

    ref3_exact = feedforward_ref(x3, gamma3, beta3, w1_3, b1_3, w2_3, b2_3,
                                 approximate=False)
    out3_f32 = jax.block_until_ready(
        feedforward_pallas(x3, gamma3, beta3, w1_3, b1_3, w2_3, b2_3,
                           compute_dtype=jnp.float32))
    assert jnp.allclose(out3_f32, ref3_exact, atol=2e-4, rtol=2e-4), "f32 mismatch (cfg3)"

    ref3_tanh = feedforward_ref(x3, gamma3, beta3, w1_3, b1_3, w2_3, b2_3,
                                approximate=True)
    out3_bf16 = jax.block_until_ready(
        feedforward_pallas(x3, gamma3, beta3, w1_3, b1_3, w2_3, b2_3))
    assert out3_bf16.shape == (B3, S3, D3)
    assert jnp.allclose(out3_bf16, ref3_tanh, atol=2e-2, rtol=2e-2), "bf16 mismatch (cfg3)"

    print("KERNEL_OK")
</pallas_src>

<mosaic_0001>
module attributes {stable_mosaic.version = 11 : i64} {
  func.func @_ffn_kernel_resident(%arg0: i32, %arg1: memref<16x32xf32, #tpu.memory_space<vmem>>, %arg2: memref<1x32xf32, #tpu.memory_space<vmem>>, %arg3: memref<1x32xf32, #tpu.memory_space<vmem>>, %arg4: memref<32x128xf32, #tpu.memory_space<vmem>>, %arg5: memref<1x128xf32, #tpu.memory_space<vmem>>, %arg6: memref<128x32xf32, #tpu.memory_space<vmem>>, %arg7: memref<1x32xf32, #tpu.memory_space<vmem>>, %arg8: memref<16x32xf32, #tpu.memory_space<vmem>>) attributes {dimension_semantics = [#tpu.dimension_semantics<parallel>], iteration_bounds = array<i64: 1>, scalar_prefetch = 0 : i64, scratch_operands = 0 : i64, tpu.core_type = #tpu.core_type<tc>, window_params = [{transform_indices = @transform_0, window_bounds = array<i64: 16, 32>}, {pipeline_mode = #tpu.pipeline_mode<synchronous>, transform_indices = @transform_1, window_bounds = array<i64: 1, 32>}, {pipeline_mode = #tpu.pipeline_mode<synchronous>, transform_indices = @transform_2, window_bounds = array<i64: 1, 32>}, {pipeline_mode = #tpu.pipeline_mode<synchronous>, transform_indices = @transform_3, window_bounds = array<i64: 32, 128>}, {pipeline_mode = #tpu.pipeline_mode<synchronous>, transform_indices = @transform_4, window_bounds = array<i64: 1, 128>}, {pipeline_mode = #tpu.pipeline_mode<synchronous>, transform_indices = @transform_5, window_bounds = array<i64: 128, 32>}, {pipeline_mode = #tpu.pipeline_mode<synchronous>, transform_indices = @transform_6, window_bounds = array<i64: 1, 32>}, {transform_indices = @transform_7, window_bounds = array<i64: 16, 32>}]} {
    %c0 = arith.constant 0 : index
    %c0_0 = arith.constant 0 : index
    %0 = vector.load %arg1[%c0, %c0_0] : memref<16x32xf32, #tpu.memory_space<vmem>>, vector<16x32xf32>
    %cst = arith.constant dense<0.000000e+00> : vector<16xf32>
    %1 = vector.multi_reduction <add>, %0, %cst [1] : vector<16x32xf32> to vector<16xf32>
    %2 = vector.shape_cast %1 : vector<16xf32> to vector<16x1xf32>
    %cst_1 = arith.constant 3.200000e+01 : f32
    %3 = vector.broadcast %cst_1 : f32 to vector<16x1xf32>
    %4 = arith.divf %2, %3 : vector<16x1xf32>
    %5 = vector.broadcast %4 : vector<16x1xf32> to vector<16x32xf32>
    %6 = arith.subf %0, %5 : vector<16x32xf32>
    %7 = arith.mulf %6, %6 : vector<16x32xf32>
    %cst_2 = arith.constant dense<0.000000e+00> : vector<16xf32>
    %8 = vector.multi_reduction <add>, %7, %cst_2 [1] : vector<16x32xf32> to vector<16xf32>
    %9 = vector.shape_cast %8 : vector<16xf32> to vector<16x1xf32>
    %cst_3 = arith.constant 3.200000e+01 : f32
    %10 = vector.broadcast %cst_3 : f32 to vector<16x1xf32>
    %11 = arith.divf %9, %10 : vector<16x1xf32>
    %cst_4 = arith.constant 9.99999974E-6 : f32
    %12 = vector.broadcast %cst_4 : f32 to vector<16x1xf32>
    %13 = arith.addf %11, %12 : vector<16x1xf32>
    %14 = math.rsqrt %13 : vector<16x1xf32>
    %15 = vector.broadcast %14 : vector<16x1xf32> to vector<16x32xf32>
    %16 = arith.mulf %6, %15 : vector<16x32xf32>
    %c0_5 = arith.constant 0 : index
    %c0_6 = arith.constant 0 : index
    %17 = vector.load %arg2[%c0_5, %c0_6] : memref<1x32xf32, #tpu.memory_space<vmem>>, vector<1x32xf32>
    %18 = vector.broadcast %17 : vector<1x32xf32> to vector<16x32xf32>
    %19 = arith.mulf %16, %18 : vector<16x32xf32>
    %c0_7 = arith.constant 0 : index
    %c0_8 = arith.constant 0 : index
    %20 = vector.load %arg3[%c0_7, %c0_8] : memref<1x32xf32, #tpu.memory_space<vmem>>, vector<1x32xf32>
    %21 = vector.broadcast %20 : vector<1x32xf32> to vector<16x32xf32>
    %22 = arith.addf %19, %21 : vector<16x32xf32>
    %c0_9 = arith.constant 0 : index
    %c0_10 = arith.constant 0 : index
    %23 = vector.load %arg4[%c0_9, %c0_10] : memref<32x128xf32, #tpu.memory_space<vmem>>, vector<32x128xf32>
    %cst_11 = arith.constant dense<0.000000e+00> : vector<16x128xf32>
    %24 = tpu.matmul %22, %23, %cst_11 {dimension_numbers = #tpu.dot_dimension_numbers<[1], [0], [0], [1], [0, 0, 1, 1], [], []>} : vector<16x32xf32>, vector<32x128xf32>, vector<16x128xf32> -> vector<16x128xf32>
    %c0_12 = arith.constant 0 : index
    %c0_13 = arith.constant 0 : index
    %25 = vector.load %arg5[%c0_12, %c0_13] : memref<1x128xf32, #tpu.memory_space<vmem>>, vector<1x128xf32>
    %26 = vector.broadcast %25 : vector<1x128xf32> to vector<16x128xf32>
    %27 = arith.addf %24, %26 : vector<16x128xf32>
    %cst_14 = arith.constant 5.000000e-01 : f32
    %28 = vector.broadcast %cst_14 : f32 to vector<16x128xf32>
    %29 = arith.mulf %28, %27 : vector<16x128xf32>
    %cst_15 = arith.constant 0.707106769 : f32
    %30 = vector.broadcast %cst_15 : f32 to vector<16x128xf32>
    %31 = arith.mulf %27, %30 : vector<16x128xf32>
    %32 = math.erf %31 : vector<16x128xf32>
    %cst_16 = arith.constant 1.000000e+00 : f32
    %33 = vector.broadcast %cst_16 : f32 to vector<16x128xf32>
    %34 = arith.addf %33, %32 : vector<16x128xf32>
    %35 = arith.mulf %29, %34 : vector<16x128xf32>
    %c0_17 = arith.constant 0 : index
    %c0_18 = arith.constant 0 : index
    %36 = vector.load %arg6[%c0_17, %c0_18] : memref<128x32xf32, #tpu.memory_space<vmem>>, vector<128x32xf32>
    %cst_19 = arith.constant dense<0.000000e+00> : vector<16x32xf32>
    %37 = tpu.matmul %35, %36, %cst_19 {dimension_numbers = #tpu.dot_dimension_numbers<[1], [0], [0], [1], [0, 0, 1, 1], [], []>} : vector<16x128xf32>, vector<128x32xf32>, vector<16x32xf32> -> vector<16x32xf32>
    %c0_20 = arith.constant 0 : index
    %c0_21 = arith.constant 0 : index
    %38 = vector.load %arg7[%c0_20, %c0_21] : memref<1x32xf32, #tpu.memory_space<vmem>>, vector<1x32xf32>
    %39 = vector.broadcast %38 : vector<1x32xf32> to vector<16x32xf32>
    %40 = arith.addf %37, %39 : vector<16x32xf32>
    %c0_22 = arith.constant 0 : index
    %c0_23 = arith.constant 0 : index
    %41 = vector.load %arg8[%c0_22, %c0_23] : memref<16x32xf32, #tpu.memory_space<vmem>>, vector<16x32xf32>
    tpu.vector_store %arg8[%c0_22, %c0_23], %40 {strides = array<i32>} : memref<16x32xf32, #tpu.memory_space<vmem>>, vector<16x32xf32>,
    return
  }
  func.func @transform_0(%arg0: i32) -> (i32, i32) {
    %c0_i32 = arith.constant 0 : i32
    %c0_i32_0 = arith.constant 0 : i32
    return %arg0, %c0_i32 : i32, i32
  }
  func.func @transform_1(%arg0: i32) -> (i32, i32) {
    %c0_i32 = arith.constant 0 : i32
    %c0_i32_0 = arith.constant 0 : i32
    %c0_i32_1 = arith.constant 0 : i32
    return %c0_i32, %c0_i32_0 : i32, i32
  }
  func.func @transform_2(%arg0: i32) -> (i32, i32) {
    %c0_i32 = arith.constant 0 : i32
    %c0_i32_0 = arith.constant 0 : i32
    %c0_i32_1 = arith.constant 0 : i32
    return %c0_i32, %c0_i32_0 : i32, i32
  }
  func.func @transform_3(%arg0: i32) -> (i32, i32) {
    %c0_i32 = arith.constant 0 : i32
    %c0_i32_0 = arith.constant 0 : i32
    %c0_i32_1 = arith.constant 0 : i32
    return %c0_i32, %c0_i32_0 : i32, i32
  }
  func.func @transform_4(%arg0: i32) -> (i32, i32) {
    %c0_i32 = arith.constant 0 : i32
    %c0_i32_0 = arith.constant 0 : i32
    %c0_i32_1 = arith.constant 0 : i32
    return %c0_i32, %c0_i32_0 : i32, i32
  }
  func.func @transform_5(%arg0: i32) -> (i32, i32) {
    %c0_i32 = arith.constant 0 : i32
    %c0_i32_0 = arith.constant 0 : i32
    %c0_i32_1 = arith.constant 0 : i32
    return %c0_i32, %c0_i32_0 : i32, i32
  }
  func.func @transform_6(%arg0: i32) -> (i32, i32) {
    %c0_i32 = arith.constant 0 : i32
    %c0_i32_0 = arith.constant 0 : i32
    %c0_i32_1 = arith.constant 0 : i32
    return %c0_i32, %c0_i32_0 : i32, i32
  }
  func.func @transform_7(%arg0: i32) -> (i32, i32) {
    %c0_i32 = arith.constant 0 : i32
    %c0_i32_0 = arith.constant 0 : i32
    return %arg0, %c0_i32 : i32, i32
  }
}

</mosaic_0001>

<llo_original>
// kernel: tpu_custom_call.1
$region0: #{tpu_custom_call.1}
  #allocation0 [shape = 'u32[]', space=smem, size = 0x4, offset = 0x4, fixed_abs, tag = 'smem constant byte address 0x4 - core index']
  #allocation1 [shape = 'u32[72,128]{1,0:T(1,128)}', space=vmem, size = 0x9000, scoped, tag = 'internal scratch']
  %s0 = inlined_call_operand.vmem [shape: f32[16,32], index: 0, kind: input, shape index: {}]
  %s1 = inlined_call_operand.vmem [shape: f32[1,32], index: 1, kind: input, shape index: {}]
  %s2 = inlined_call_operand.vmem [shape: f32[1,32], index: 2, kind: input, shape index: {}]
  %s3 = inlined_call_operand.vmem [shape: f32[32,128], index: 3, kind: input, shape index: {}]
  %s4 = inlined_call_operand.vmem [shape: f32[1,128], index: 4, kind: input, shape index: {}]
  %s5 = inlined_call_operand.vmem [shape: f32[128,32], index: 5, kind: input, shape index: {}]
  %s6 = inlined_call_operand.vmem [shape: f32[1,32], index: 6, kind: input, shape index: {}]
  %s7 = inlined_call_operand.hbm [shape: f32[16,32], index: 7, kind: output, shape index: {}]
  %s8 = sld [smem:[#allocation0]]
  $region38: #{tpu_custom_call.1} parent=0
    _
  %s10 = ssub.s32 1, %s8
  %s11 = scalar_select 0, %s10, %s8
  $region1: #{tpu_custom_call.1} parent=0
    #allocation2 [shape = 'u8[8192]{0}', space=vmem, size = 0x2000, scoped, tag = 'output window, operand 0, single buffered']
    #allocation3 [shape = 's32[1]{0}', space=sflag, size = 0x4, scoped, tag = 'scoped memory for tpu_custom_call.1']
    %12 = vsyncpa [#allocation3], 0
    // Predicated region
    $region2: #{tpu_custom_call.1} parent=1 // pred_check
      _
    $region3: #{tpu_custom_call.1} parent=1 // pred_check_branch
      %14 = sbr.rel (0) target = $region5
    $region4: #{tpu_custom_call.1} parent=1 // pred_region
      _
    $region5: #{tpu_custom_call.1} parent=1 // pred_fallthru
      _
    // Predicated region
    $region6: #{tpu_custom_call.1} parent=1 // pred_check
      _
    $region7: #{tpu_custom_call.1} parent=1 // pred_check_branch
      %16 = sbr.rel (0) target = $region9
    $region8: #{tpu_custom_call.1} parent=1 // pred_region
      _
    $region9: #{tpu_custom_call.1} parent=1 // pred_fallthru
      _
    // Predicated region
    $region10: #{tpu_custom_call.1} parent=1 // pred_check
      _
    $region11: #{tpu_custom_call.1} parent=1 // pred_check_branch
      %18 = sbr.rel (0) target = $region13
    $region12: #{tpu_custom_call.1} parent=1 // pred_region
      _
    $region13: #{tpu_custom_call.1} parent=1 // pred_fallthru
      _
    // Predicated region
    $region14: #{tpu_custom_call.1} parent=1 // pred_check
      _
    $region15: #{tpu_custom_call.1} parent=1 // pred_check_branch
      %20 = sbr.rel (0) target = $region17
    $region16: #{tpu_custom_call.1} parent=1 // pred_region
      _
    $region17: #{tpu_custom_call.1} parent=1 // pred_fallthru
      _
    // Predicated region
    $region18: #{tpu_custom_call.1} parent=1 // pred_check
      _
    $region19: #{tpu_custom_call.1} parent=1 // pred_check_branch
      %22 = sbr.rel (0) target = $region21
    $region20: #{tpu_custom_call.1} parent=1 // pred_region
      _
    $region21: #{tpu_custom_call.1} parent=1 // pred_fallthru
      _
    // Predicated region
    $region22: #{tpu_custom_call.1} parent=1 // pred_check
      _
    $region23: #{tpu_custom_call.1} parent=1 // pred_check_branch
      %24 = sbr.rel (0) target = $region25
    $region24: #{tpu_custom_call.1} parent=1 // pred_region
      _
    $region25: #{tpu_custom_call.1} parent=1 // pred_fallthru
      _
    // Predicated region
    $region26: #{tpu_custom_call.1} parent=1 // pred_check
      _
    $region27: #{tpu_custom_call.1} parent=1 // pred_check_branch
      %26 = sbr.rel (0) target = $region29
    $region28: #{tpu_custom_call.1} parent=1 // pred_region
      _
    $region29: #{tpu_custom_call.1} parent=1 // pred_fallthru
      _
    %v27 = vld [vmem:[%s0] sm:$0xff]
    %v28 = vld [vmem:[%s0 + $0x8] sm:$0xff]
    %vm29 = vcmask 261120
    %v30 = vsel %vm29, %v27, 0.0
    %31 = vadd.xlane.f32.xlu0 %v30
    %v32 = vpop.xlane.xlu0 %31
    %v33 = vsel %vm29, %v28, 0.0
    %34 = vadd.xlane.f32.xlu0 %v33
    %v35 = vpop.xlane.xlu0 %34
    %v36 = vrcp.pop 32.0
    %v37 = vmul.f32 32.0, %v36
    %v38 = vsub.f32 1.0, %v37
    %v39 = vmul.f32 %v36, %v38
    %v40 = vadd.f32 %v36, %v39
    %vm41 = vweird.f32 %v36
    %v42 = vsel %vm41, %v36, %v40
    %v43 = vmul.f32 %v32, %v42
    %v44 = vmul.f32 %v35, %v42
    %v45 = vsub.f32 %v27, %v43
    %v46 = vsub.f32 %v28, %v44
    %v47 = vmul.f32 %v45, %v45
    %v48 = vmul.f32 %v46, %v46
    %v49 = vsel %vm29, %v47, 0.0
    %50 = vadd.xlane.f32.xlu0 %v49
    %v51 = vpop.xlane.xlu0 %50
    %v52 = vsel %vm29, %v48, 0.0
    %53 = vadd.xlane.f32.xlu0 %v52
    %v54 = vpop.xlane.xlu0 %53
    %v55 = vmul.f32 %v51, %v42
    %v56 = vmul.f32 %v54, %v42
    %v57 = vadd.f32 %v55, 1e-05
    %v58 = vadd.f32 %v56, 1e-05
    %v59 = vrsqrt.pop %v57
    %v60 = vmul.f32 %v59, %v57
    %v61 = vmul.f32 %v60, %v59
    %v62 = vmul.f32 0.5, %v61
    %v63 = vsub.f32 1.5, %v62
    %v64 = vmul.f32 %v59, %v63
    %vm65 = vweird.f32 %v57
    %vm66 = vweird.f32 %v59
    %vm67 = vmor %vm65, %vm66
    %v68 = vsel %vm67, %v59, %v64
    %v69 = vrsqrt.pop %v58
    %v70 = vmul.f32 %v69, %v58
    %v71 = vmul.f32 %v70, %v69
    %v72 = vmul.f32 0.5, %v71
    %v73 = vsub.f32 1.5, %v72
    %v74 = vmul.f32 %v69, %v73
    %vm75 = vweird.f32 %v58
    %vm76 = vweird.f32 %v69
    %vm77 = vmor %vm75, %vm76
    %v78 = vsel %vm77, %v69, %v74
    %v79 = vmul.f32 %v45, %v68
    %v80 = vmul.f32 %v46, %v78
    %v81 = vld [vmem:[%s1] sm:$0x1]
    %v83 = vperm.slane %v81, 0
    %v85 = vmul.f32 %v79, %v83
    %v86 = vmul.f32 %v80, %v83
    %v87 = vld [vmem:[%s2] sm:$0x1]
    %v89 = vperm.slane %v87, 0
    %v91 = vadd.f32 %v85, %v89
    %v92 = vadd.f32 %v86, %v89
    %v93 = vld [vmem:[%s3] sm:$0xff]
    %v94 = vld [vmem:[%s3 + $0x8] sm:$0xff]
    %v95 = vld [vmem:[%s3 + $0x10] sm:$0xff]
    %v96 = vld [vmem:[%s3 + $0x18] sm:$0xff]
    %v97 = vld [vmem:[%s4] sm:$0x1]
    %v99 = vperm.slane %v97, 0
    %v102 = vsel %vm29, %v91, 0
    %v105 = vsel %vm29, %v92, 0
    %107 = vmatpush.msra.mxu0 0.0
    %108 = vmatpush.msra.mxu0 0.0
    %109 = vmatpush.msra.mxu0 0.0
    %110 = vmatpush.msra.mxu0 0.0
    %111 = vmatpush.msra.mxu0 0.0
    %112 = vmatpush.msra.mxu0 0.0
    %113 = vmatpush.msra.mxu0 0.0
    %114 = vmatpush.msra.mxu0 0.0
    %115 = vmatpush.msra.mxu0 0.0
    %116 = vmatpush.msra.mxu0 0.0
    %117 = vmatpush.msra.mxu0 0.0
    %118 = vmatpush.msra.mxu0 0.0
    %119 = vmatpush.msra.mxu0 %v96
    %120 = vmatpush.msra.mxu0 %v95
    %121 = vmatpush.msra.mxu0 %v94
    %122 = vmatpush.msra.mxu0 %v93
    %123 = vmatmul.f32.gmra.mxu0 %v102
    %v124 = vpop.f32.mrf.mxu0
    %v125 = vadd.f32 %v99, %v124
    %126 = vmatmul.f32.gmra.mxu0 %v105
    %v127 = vpop.f32.mrf.mxu0
    %v128 = vadd.f32 %v99, %v127
    %129 = vdwg.mxu0
    %v130 = vmul.f32 %v125, 0.5
    %v131 = vmul.f32 %v128, 0.5
    %v132 = vmul.f32 %v125, 0.70710677
    %v133 = vmul.f32 %v128, 0.70710677
    %v134 = vmul.f32 %v132, %v132
    %v135 = vmin.f32 16.0, %v134
    %v136 = vmul.f32 %v135, 2.1237322e-06
    %v137 = vadd.f32 %v136, 0.00028619796
    %v138 = vmul.f32 %v135, %v137
    %v139 = vadd.f32 %v138, 0.0036580483
    %v140 = vmul.f32 %v135, %v139
    %v141 = vadd.f32 %v140, 0.05243302
    %v142 = vmul.f32 %v135, %v141
    %v143 = vadd.f32 %v142, 0.18741608
    %v144 = vmul.f32 %v135, %v143
    %v145 = vadd.f32 %v144, 1.1283791
    %v146 = vmul.f32 %v132, %v145
    %v147 = vmul.f32 %v135, 3.8918573e-05
    %v148 = vadd.f32 %v147, 0.001143296
    %v149 = vmul.f32 %v135, %v148
    %v150 = vadd.f32 %v149, 0.014752088
    %v151 = vmul.f32 %v135, %v150
    %v152 = vadd.f32 %v151, 0.112945676
    %v153 = vmul.f32 %v135, %v152
    %v154 = vadd.f32 %v153, 0.4994258
    %v155 = vmul.f32 %v135, %v154
    %v156 = vadd.f32 %v155, 1.0
    %v157 = vrcp.pop %v156
    %v158 = vmul.f32 %v156, %v157
    %v159 = vsub.f32 1.0, %v158
    %v160 = vmul.f32 %v157, %v159
    %v161 = vadd.f32 %v157, %v160
    %vm162 = vweird.f32 %v156
    %vm163 = vweird.f32 %v157
    %vm164 = vmor %vm162, %vm163
    %v165 = vsel %vm164, %v157, %v161
    %v166 = vand.u32 2147483647, %v156
    %vm167 = vcmp.eq.f32.partialorder %v166, 8.507059e+37
    %v168 = vand.u32 %v156, 2147483648
    %v169 = vor.u32 1.1754944e-38, %v168
    %v170 = vsel %vm167, %v169, %v165
    %v171 = vmul.f32 %v146, %v170
    %v172 = vmin.f32 %v171, 1.0
    %v173 = vmax.f32 %v172, -1.0
    %v174 = vmul.f32 %v133, %v133
    %v175 = vmin.f32 16.0, %v174
    %v176 = vmul.f32 %v175, 2.1237322e-06
    %v177 = vadd.f32 %v176, 0.00028619796
    %v178 = vmul.f32 %v175, %v177
    %v179 = vadd.f32 %v178, 0.0036580483
    %v180 = vmul.f32 %v175, %v179
    %v181 = vadd.f32 %v180, 0.05243302
    %v182 = vmul.f32 %v175, %v181
    %v183 = vadd.f32 %v182, 0.18741608
    %v184 = vmul.f32 %v175, %v183
    %v185 = vadd.f32 %v184, 1.1283791
    %v186 = vmul.f32 %v133, %v185
    %v187 = vmul.f32 %v175, 3.8918573e-05
    %v188 = vadd.f32 %v187, 0.001143296
    %v189 = vmul.f32 %v175, %v188
    %v190 = vadd.f32 %v189, 0.014752088
    %v191 = vmul.f32 %v175, %v190
    %v192 = vadd.f32 %v191, 0.112945676
    %v193 = vmul.f32 %v175, %v192
    %v194 = vadd.f32 %v193, 0.4994258
    %v195 = vmul.f32 %v175, %v194
    %v196 = vadd.f32 %v195, 1.0
    %v197 = vrcp.pop %v196
    %v198 = vmul.f32 %v196, %v197
    %v199 = vsub.f32 1.0, %v198
    %v200 = vmul.f32 %v197, %v199
    %v201 = vadd.f32 %v197, %v200
    %vm202 = vweird.f32 %v196
    %vm203 = vweird.f32 %v197
    %vm204 = vmor %vm202, %vm203
    %v205 = vsel %vm204, %v197, %v201
    %v206 = vand.u32 2147483647, %v196
    %vm207 = vcmp.eq.f32.partialorder %v206, 8.507059e+37
    %v208 = vand.u32 %v196, 2147483648
    %v209 = vor.u32 1.1754944e-38, %v208
    %v210 = vsel %vm207, %v209, %v205
    %v211 = vmul.f32 %v186, %v210
    %v212 = vmin.f32 %v211, 1.0
    %v213 = vmax.f32 %v212, -1.0
    %v214 = vadd.f32 %v173, 1.0
    %v215 = vadd.f32 %v213, 1.0
    %v216 = vmul.f32 %v130, %v214
    %v217 = vmul.f32 %v131, %v215
    %v218 = vld [vmem:[%s5] sm:$0xff]
    %v219 = vld [vmem:[%s5 + $0x8] sm:$0xff]
    %v220 = vld [vmem:[%s5 + $0x10] sm:$0xff]
    %v221 = vld [vmem:[%s5 + $0x18] sm:$0xff]
    %v222 = vld [vmem:[%s5 + $0x20] sm:$0xff]
    %v223 = vld [vmem:[%s5 + $0x28] sm:$0xff]
    %v224 = vld [vmem:[%s5 + $0x30] sm:$0xff]
    %v225 = vld [vmem:[%s5 + $0x38] sm:$0xff]
    %v226 = vld [vmem:[%s5 + $0x40] sm:$0xff]
    %v227 = vld [vmem:[%s5 + $0x48] sm:$0xff]
    %v228 = vld [vmem:[%s5 + $0x50] sm:$0xff]
    %v229 = vld [vmem:[%s5 + $0x58] sm:$0xff]
    %v230 = vld [vmem:[%s5 + $0x60] sm:$0xff]
    %v231 = vld [vmem:[%s5 + $0x68] sm:$0xff]
    %v232 = vld [vmem:[%s5 + $0x70] sm:$0xff]
    %v233 = vld [vmem:[%s5 + $0x78] sm:$0xff]
    %v234 = vld [vmem:[%s6] sm:$0x1]
    %v236 = vperm.slane %v234, 0
    %238 = vmatpush.msra.mxu0 %v233
    %239 = vmatpush.msra.mxu0 %v232
    %240 = vmatpush.msra.mxu0 %v231
    %241 = vmatpush.msra.mxu0 %v230
    %242 = vmatpush.msra.mxu0 %v229
    %243 = vmatpush.msra.mxu0 %v228
    %244 = vmatpush.msra.mxu0 %v227
    %245 = vmatpush.msra.mxu0 %v226
    %246 = vmatpush.msra.mxu0 %v225
    %247 = vmatpush.msra.mxu0 %v224
    %248 = vmatpush.msra.mxu0 %v223
    %249 = vmatpush.msra.mxu0 %v222
    %250 = vmatpush.msra.mxu0 %v221
    %251 = vmatpush.msra.mxu0 %v220
    %252 = vmatpush.msra.mxu0 %v219
    %253 = vmatpush.msra.mxu0 %v218
    %254 = vmatmul.f32.gmra.mxu0 %v216
    %v255 = vpop.f32.mrf.mxu0
    %v256 = vadd.f32 %v236, %v255
    %257 = vmatmul.f32.gmra.mxu0 %v217
    %v258 = vpop.f32.mrf.mxu0
    %v259 = vadd.f32 %v236, %v258
    %260 = vdwg.mxu0
    %261 = vst.msk [vmem:[#allocation2] sm:$0xff] %vm29, %v256
    %262 = vst.msk [vmem:[#allocation2 + $0x8] sm:$0xff] %vm29, %v259
    // Predicated region
    $region30: #{tpu_custom_call.1} parent=1 // pred_check
      _
    $region31: #{tpu_custom_call.1} parent=1 // pred_check_branch
      %264 = sbr.rel (0) target = $region33
    $region32: #{tpu_custom_call.1} parent=1 // pred_region
      %266 = vsyncadd [#allocation3], 0
      %s267 = sshll.u32 [#allocation2], 4
      %s268 = int_to_ptr.vmem [resolvable:$true] %s267
      %s269 = sshll.u32 %s7, 4
      %s270 = int_to_ptr.hbm [resolvable:$true] %s269
      %275 = dma.vmem_to_hbm [thread:$0]  %s268, 256, %s270, [#allocation3], 128, 128, 8
    $region33: #{tpu_custom_call.1} parent=1 // pred_fallthru
      _
    // Predicated region
    $region34: #{tpu_custom_call.1} parent=1 // pred_check
      _
    $region35: #{tpu_custom_call.1} parent=1 // pred_check_branch
      %277 = sbr.rel (0) target = $region37
    $region36: #{tpu_custom_call.1} parent=1 // pred_region
      %279 = dma.done [#allocation3], 256
    $region37: #{tpu_custom_call.1} parent=1 // pred_fallthru
      _
    %280 = vsyncpa [#allocation3], 1

</llo_original>
